<compile_context>
chip_gen: v5e
topology: v5e:2x2
jax: 0.10.0
libtpu: 0.0.40
codegen_flags: <defaults>
</compile_context>

<pallas_src>
import functools

import jax
import jax.numpy as jnp
from jax.experimental import pallas as pl
from jax.experimental.pallas import tpu as pltpu


def _mlp_kernel(x_ref, w1_ref, b1_ref, w2_ref, b2_ref, w4_ref, b4_ref, o_ref):
    x = x_ref[...]  # native dtype; promoted by the dot below (cast hides under MXU)
    # fc1 + ReLU
    h1 = jnp.dot(x, w1_ref[...], preferred_element_type=jnp.float32)
    h1 = jnp.maximum(h1 + b1_ref[...], 0.0)
    # fc2 + ReLU
    h2 = jnp.dot(h1, w2_ref[...], preferred_element_type=jnp.float32)
    h2 = jnp.maximum(h2 + b2_ref[...], 0.0)
    # fc4 (no activation)
    out = jnp.dot(h2, w4_ref[...], preferred_element_type=jnp.float32) + b4_ref[...]
    o_ref[...] = out.astype(o_ref.dtype)


# Conservative budget for the double-buffered batch tiles (x + out + activation
# slack).  Chosen to stay comfortably inside v7x's 32 MiB default scoped VMEM
# (64 MiB physical per TC) while being a non-factor on v5e/v6e.
_TILE_VMEM_BUDGET_BYTES = 24 * 1024 * 1024


def _pick_batch_tile(requested, b, dim_in, dim_out, itemsize):
    # 2 buffers each for x and out, plus ~96 f32 columns of hidden activations.
    per_row_bytes = 2 * (dim_in + dim_out + 96) * max(itemsize, 4)
    cap = max(8, _TILE_VMEM_BUDGET_BYTES // per_row_bytes)
    tile = min(int(requested), int(cap))
    tile = max(8, (tile // 8) * 8)          # keep sublane alignment
    if b <= tile:
        return max(b, 1)                    # single exact block (== full array dim)
    return tile


@functools.partial(jax.jit, static_argnames=("dim_in", "batch_tile"))
def attack_adv_train_forward(x, params, *, dim_in, batch_tile=1024):
    """Forward pass of AttackAdvTrain.

    x      : any shape whose total size is a multiple of dim_in (torch x.view(-1, dim_in))
    params : dict with 'w1' [dim_in,64], 'b1' [64], 'w2' [64,32], 'b2' [32],
             'w4' [32,dim_out], 'b4' [dim_out]   (weights already transposed vs torch)
    """
    x2 = x.reshape(-1, dim_in)              # no dtype cast here; cast happens in-kernel
    b = x2.shape[0]
    dim_out = params["w4"].shape[1]

    if b == 0:
        return jnp.zeros((0, dim_out), jnp.float32)

    tile = _pick_batch_tile(batch_tile, b, dim_in, dim_out, x2.dtype.itemsize)
    grid = (pl.cdiv(b, tile),)              # ragged last block handled by Pallas masking

    w1 = params["w1"].astype(jnp.float32)
    b1 = params["b1"].reshape(1, -1).astype(jnp.float32)
    w2 = params["w2"].astype(jnp.float32)
    b2 = params["b2"].reshape(1, -1).astype(jnp.float32)
    w4 = params["w4"].astype(jnp.float32)
    b4 = params["b4"].reshape(1, -1).astype(jnp.float32)

    out = pl.pallas_call(
        _mlp_kernel,
        out_shape=jax.ShapeDtypeStruct((b, dim_out), jnp.float32),
        grid_spec=pltpu.PrefetchScalarGridSpec(
            num_scalar_prefetch=0,
            grid=grid,
            in_specs=[
                pl.BlockSpec((tile, dim_in), lambda i: (i, 0)),   # x tile (pipelined)
                pl.BlockSpec((dim_in, 64), lambda i: (0, 0)),     # w1 (resident)
                pl.BlockSpec((1, 64), lambda i: (0, 0)),          # b1
                pl.BlockSpec((64, 32), lambda i: (0, 0)),         # w2
                pl.BlockSpec((1, 32), lambda i: (0, 0)),          # b2
                pl.BlockSpec((32, dim_out), lambda i: (0, 0)),    # w4
                pl.BlockSpec((1, dim_out), lambda i: (0, 0)),     # b4
            ],
            out_specs=pl.BlockSpec((tile, dim_out), lambda i: (i, 0)),
        ),
        compiler_params=pltpu.CompilerParams(
            # batch axis is independent -> sharded across the 2 TCs on v7x
            dimension_semantics=("parallel",)
        ),
    )(x2, w1, b1, w2, b2, w4, b4)

    return out


def init_params(key, dim_in, dim_out):
    """Deterministic init mirroring nn.Linear shapes (weights stored transposed)."""
    k1, k2, k3, k4, k5, k6 = jax.random.split(key, 6)

    def uniform(k, shape, fan_in):
        bound = 1.0 / jnp.sqrt(fan_in)
        return jax.random.uniform(k, shape, jnp.float32, -bound, bound)

    return {
        "w1": uniform(k1, (dim_in, 64), dim_in),
        "b1": uniform(k2, (64,), dim_in),
        "w2": uniform(k3, (64, 32), 64),
        "b2": uniform(k4, (32,), 64),
        "w4": uniform(k5, (32, dim_out), 32),
        "b4": uniform(k6, (dim_out,), 32),
    }


def reference_forward(x, params, dim_in):
    x2 = x.reshape(-1, dim_in).astype(jnp.float32)
    h1 = jnp.maximum(x2 @ params["w1"] + params["b1"], 0.0)
    h2 = jnp.maximum(h1 @ params["w2"] + params["b2"], 0.0)
    return h2 @ params["w4"] + params["b4"]


if __name__ == "__main__":
    dim_in, dim_out = 32, 4
    key = jax.random.PRNGKey(0)
    kx1, kx2, kp = jax.random.split(key, 3)
    params = init_params(kp, dim_in, dim_out)

    # Case 1: small batch -> single exact block (tile clamps to the batch size).
    x_small = jax.random.normal(kx1, (10, dim_in), jnp.float32)
    out_small = jax.block_until_ready(
        attack_adv_train_forward(x_small, params, dim_in=dim_in))
    ref_small = reference_forward(x_small, params, dim_in)
    assert out_small.shape == (10, dim_out), out_small.shape
    assert jnp.allclose(out_small, ref_small, atol=1e-5, rtol=1e-5), (
        jnp.max(jnp.abs(out_small - ref_small)))

    # Case 2: multi-block grid with a ragged last block (no wrapper-side padding).
    x_big = jax.random.normal(kx2, (37, dim_in), jnp.float32)
    out_big = jax.block_until_ready(
        attack_adv_train_forward(x_big, params, dim_in=dim_in, batch_tile=16))
    ref_big = reference_forward(x_big, params, dim_in)
    assert out_big.shape == (37, dim_out), out_big.shape
    assert jnp.allclose(out_big, ref_big, atol=1e-5, rtol=1e-5), (
        jnp.max(jnp.abs(out_big - ref_big)))

    print("KERNEL_OK")
</pallas_src>

<mosaic_0001>
module attributes {stable_mosaic.version = 11 : i64} {
  func.func @_mlp_kernel(%arg0: i32, %arg1: memref<10x32xf32, #tpu.memory_space<vmem>>, %arg2: memref<32x64xf32, #tpu.memory_space<vmem>>, %arg3: memref<1x64xf32, #tpu.memory_space<vmem>>, %arg4: memref<64x32xf32, #tpu.memory_space<vmem>>, %arg5: memref<1x32xf32, #tpu.memory_space<vmem>>, %arg6: memref<32x4xf32, #tpu.memory_space<vmem>>, %arg7: memref<1x4xf32, #tpu.memory_space<vmem>>, %arg8: memref<10x4xf32, #tpu.memory_space<vmem>>) attributes {dimension_semantics = [#tpu.dimension_semantics<parallel>], iteration_bounds = array<i64: 1>, scalar_prefetch = 0 : i64, scratch_operands = 0 : i64, tpu.core_type = #tpu.core_type<tc>, window_params = [{transform_indices = @transform_0, window_bounds = array<i64: 10, 32>}, {pipeline_mode = #tpu.pipeline_mode<synchronous>, transform_indices = @transform_1, window_bounds = array<i64: 32, 64>}, {pipeline_mode = #tpu.pipeline_mode<synchronous>, transform_indices = @transform_2, window_bounds = array<i64: 1, 64>}, {pipeline_mode = #tpu.pipeline_mode<synchronous>, transform_indices = @transform_3, window_bounds = array<i64: 64, 32>}, {pipeline_mode = #tpu.pipeline_mode<synchronous>, transform_indices = @transform_4, window_bounds = array<i64: 1, 32>}, {pipeline_mode = #tpu.pipeline_mode<synchronous>, transform_indices = @transform_5, window_bounds = array<i64: 32, 4>}, {pipeline_mode = #tpu.pipeline_mode<synchronous>, transform_indices = @transform_6, window_bounds = array<i64: 1, 4>}, {transform_indices = @transform_7, window_bounds = array<i64: 10, 4>}]} {
    %c0 = arith.constant 0 : index
    %c0_0 = arith.constant 0 : index
    %0 = vector.load %arg1[%c0, %c0_0] : memref<10x32xf32, #tpu.memory_space<vmem>>, vector<10x32xf32>
    %c0_1 = arith.constant 0 : index
    %c0_2 = arith.constant 0 : index
    %1 = vector.load %arg2[%c0_1, %c0_2] : memref<32x64xf32, #tpu.memory_space<vmem>>, vector<32x64xf32>
    %cst = arith.constant dense<0.000000e+00> : vector<10x64xf32>
    %2 = tpu.matmul %0, %1, %cst {dimension_numbers = #tpu.dot_dimension_numbers<[1], [0], [0], [1], [0, 0, 1, 1], [], []>} : vector<10x32xf32>, vector<32x64xf32>, vector<10x64xf32> -> vector<10x64xf32>
    %c0_3 = arith.constant 0 : index
    %c0_4 = arith.constant 0 : index
    %3 = vector.load %arg3[%c0_3, %c0_4] : memref<1x64xf32, #tpu.memory_space<vmem>>, vector<1x64xf32>
    %4 = vector.broadcast %3 : vector<1x64xf32> to vector<10x64xf32>
    %5 = arith.addf %2, %4 : vector<10x64xf32>
    %cst_5 = arith.constant 0.000000e+00 : f32
    %6 = vector.broadcast %cst_5 : f32 to vector<10x64xf32>
    %7 = arith.maximumf %5, %6 : vector<10x64xf32>
    %c0_6 = arith.constant 0 : index
    %c0_7 = arith.constant 0 : index
    %8 = vector.load %arg4[%c0_6, %c0_7] : memref<64x32xf32, #tpu.memory_space<vmem>>, vector<64x32xf32>
    %cst_8 = arith.constant dense<0.000000e+00> : vector<10x32xf32>
    %9 = tpu.matmul %7, %8, %cst_8 {dimension_numbers = #tpu.dot_dimension_numbers<[1], [0], [0], [1], [0, 0, 1, 1], [], []>} : vector<10x64xf32>, vector<64x32xf32>, vector<10x32xf32> -> vector<10x32xf32>
    %c0_9 = arith.constant 0 : index
    %c0_10 = arith.constant 0 : index
    %10 = vector.load %arg5[%c0_9, %c0_10] : memref<1x32xf32, #tpu.memory_space<vmem>>, vector<1x32xf32>
    %11 = vector.broadcast %10 : vector<1x32xf32> to vector<10x32xf32>
    %12 = arith.addf %9, %11 : vector<10x32xf32>
    %cst_11 = arith.constant 0.000000e+00 : f32
    %13 = vector.broadcast %cst_11 : f32 to vector<10x32xf32>
    %14 = arith.maximumf %12, %13 : vector<10x32xf32>
    %c0_12 = arith.constant 0 : index
    %c0_13 = arith.constant 0 : index
    %15 = vector.load %arg6[%c0_12, %c0_13] : memref<32x4xf32, #tpu.memory_space<vmem>>, vector<32x4xf32>
    %cst_14 = arith.constant dense<0.000000e+00> : vector<10x4xf32>
    %16 = tpu.matmul %14, %15, %cst_14 {dimension_numbers = #tpu.dot_dimension_numbers<[1], [0], [0], [1], [0, 0, 1, 1], [], []>} : vector<10x32xf32>, vector<32x4xf32>, vector<10x4xf32> -> vector<10x4xf32>
    %c0_15 = arith.constant 0 : index
    %c0_16 = arith.constant 0 : index
    %17 = vector.load %arg7[%c0_15, %c0_16] : memref<1x4xf32, #tpu.memory_space<vmem>>, vector<1x4xf32>
    %18 = vector.broadcast %17 : vector<1x4xf32> to vector<10x4xf32>
    %19 = arith.addf %16, %18 : vector<10x4xf32>
    %c0_17 = arith.constant 0 : index
    %c0_18 = arith.constant 0 : index
    %20 = vector.load %arg8[%c0_17, %c0_18] : memref<10x4xf32, #tpu.memory_space<vmem>>, vector<10x4xf32>
    tpu.vector_store %arg8[%c0_17, %c0_18], %19 {strides = array<i32>} : memref<10x4xf32, #tpu.memory_space<vmem>>, vector<10x4xf32>,
    return
  }
  func.func @transform_0(%arg0: i32) -> (i32, i32) {
    %c0_i32 = arith.constant 0 : i32
    %c0_i32_0 = arith.constant 0 : i32
    return %arg0, %c0_i32 : i32, i32
  }
  func.func @transform_1(%arg0: i32) -> (i32, i32) {
    %c0_i32 = arith.constant 0 : i32
    %c0_i32_0 = arith.constant 0 : i32
    %c0_i32_1 = arith.constant 0 : i32
    return %c0_i32, %c0_i32_0 : i32, i32
  }
  func.func @transform_2(%arg0: i32) -> (i32, i32) {
    %c0_i32 = arith.constant 0 : i32
    %c0_i32_0 = arith.constant 0 : i32
    %c0_i32_1 = arith.constant 0 : i32
    return %c0_i32, %c0_i32_0 : i32, i32
  }
  func.func @transform_3(%arg0: i32) -> (i32, i32) {
    %c0_i32 = arith.constant 0 : i32
    %c0_i32_0 = arith.constant 0 : i32
    %c0_i32_1 = arith.constant 0 : i32
    return %c0_i32, %c0_i32_0 : i32, i32
  }
  func.func @transform_4(%arg0: i32) -> (i32, i32) {
    %c0_i32 = arith.constant 0 : i32
    %c0_i32_0 = arith.constant 0 : i32
    %c0_i32_1 = arith.constant 0 : i32
    return %c0_i32, %c0_i32_0 : i32, i32
  }
  func.func @transform_5(%arg0: i32) -> (i32, i32) {
    %c0_i32 = arith.constant 0 : i32
    %c0_i32_0 = arith.constant 0 : i32
    %c0_i32_1 = arith.constant 0 : i32
    return %c0_i32, %c0_i32_0 : i32, i32
  }
  func.func @transform_6(%arg0: i32) -> (i32, i32) {
    %c0_i32 = arith.constant 0 : i32
    %c0_i32_0 = arith.constant 0 : i32
    %c0_i32_1 = arith.constant 0 : i32
    return %c0_i32, %c0_i32_0 : i32, i32
  }
  func.func @transform_7(%arg0: i32) -> (i32, i32) {
    %c0_i32 = arith.constant 0 : i32
    %c0_i32_0 = arith.constant 0 : i32
    return %arg0, %c0_i32 : i32, i32
  }
}

</mosaic_0001>

<llo_original>
// kernel: attack_adv_train_forward.1
$region0: #{attack_adv_train_forward.1}
  #allocation0 [shape = 'u32[]', space=smem, size = 0x4, offset = 0x4, fixed_abs, tag = 'smem constant byte address 0x4 - core index']
  #allocation1 [shape = 'u32[72,128]{1,0:T(1,128)}', space=vmem, size = 0x9000, scoped, tag = 'internal scratch']
  %s0 = inlined_call_operand.vmem [shape: f32[10,32], index: 0, kind: input, shape index: {}]
  %s1 = inlined_call_operand.vmem [shape: f32[32,64], index: 1, kind: input, shape index: {}]
  %s2 = inlined_call_operand.vmem [shape: f32[1,64], index: 2, kind: input, shape index: {}]
  %s3 = inlined_call_operand.vmem [shape: f32[64,32], index: 3, kind: input, shape index: {}]
  %s4 = inlined_call_operand.vmem [shape: f32[1,32], index: 4, kind: input, shape index: {}]
  %s5 = inlined_call_operand.vmem [shape: f32[32,4], index: 5, kind: input, shape index: {}]
  %s6 = inlined_call_operand.vmem [shape: f32[1,4], index: 6, kind: input, shape index: {}]
  %s7 = inlined_call_operand.vmem [shape: f32[10,4], index: 7, kind: output, shape index: {}]
  %s8 = sld [smem:[#allocation0]]
  $region38: #{attack_adv_train_forward.1} parent=0
    _
  %s10 = ssub.s32 1, %s8
  %s11 = scalar_select 0, %s10, %s8
  // Predicated region
  $region2: #{attack_adv_train_forward.1} parent=0 // pred_check
    _
  $region3: #{attack_adv_train_forward.1} parent=0 // pred_check_branch
    %13 = sbr.rel (0) target = $region5
  $region4: #{attack_adv_train_forward.1} parent=0 // pred_region
    _
  $region5: #{attack_adv_train_forward.1} parent=0 // pred_fallthru
    _
  // Predicated region
  $region6: #{attack_adv_train_forward.1} parent=0 // pred_check
    _
  $region7: #{attack_adv_train_forward.1} parent=0 // pred_check_branch
    %15 = sbr.rel (0) target = $region9
  $region8: #{attack_adv_train_forward.1} parent=0 // pred_region
    _
  $region9: #{attack_adv_train_forward.1} parent=0 // pred_fallthru
    _
  // Predicated region
  $region10: #{attack_adv_train_forward.1} parent=0 // pred_check
    _
  $region11: #{attack_adv_train_forward.1} parent=0 // pred_check_branch
    %17 = sbr.rel (0) target = $region13
  $region12: #{attack_adv_train_forward.1} parent=0 // pred_region
    _
  $region13: #{attack_adv_train_forward.1} parent=0 // pred_fallthru
    _
  // Predicated region
  $region14: #{attack_adv_train_forward.1} parent=0 // pred_check
    _
  $region15: #{attack_adv_train_forward.1} parent=0 // pred_check_branch
    %19 = sbr.rel (0) target = $region17
  $region16: #{attack_adv_train_forward.1} parent=0 // pred_region
    _
  $region17: #{attack_adv_train_forward.1} parent=0 // pred_fallthru
    _
  // Predicated region
  $region18: #{attack_adv_train_forward.1} parent=0 // pred_check
    _
  $region19: #{attack_adv_train_forward.1} parent=0 // pred_check_branch
    %21 = sbr.rel (0) target = $region21
  $region20: #{attack_adv_train_forward.1} parent=0 // pred_region
    _
  $region21: #{attack_adv_train_forward.1} parent=0 // pred_fallthru
    _
  // Predicated region
  $region22: #{attack_adv_train_forward.1} parent=0 // pred_check
    _
  $region23: #{attack_adv_train_forward.1} parent=0 // pred_check_branch
    %23 = sbr.rel (0) target = $region25
  $region24: #{attack_adv_train_forward.1} parent=0 // pred_region
    _
  $region25: #{attack_adv_train_forward.1} parent=0 // pred_fallthru
    _
  // Predicated region
  $region26: #{attack_adv_train_forward.1} parent=0 // pred_check
    _
  $region27: #{attack_adv_train_forward.1} parent=0 // pred_check_branch
    %25 = sbr.rel (0) target = $region29
  $region28: #{attack_adv_train_forward.1} parent=0 // pred_region
    _
  $region29: #{attack_adv_train_forward.1} parent=0 // pred_fallthru
    _
  %v26 = vld [vmem:[%s0] sm:$0xff]
  %v27 = vld [vmem:[%s0 + $0x8] sm:$0x3]
  %v28 = vld [vmem:[%s1] sm:$0xff]
  %v29 = vld [vmem:[%s1 + $0x8] sm:$0xff]
  %v30 = vld [vmem:[%s1 + $0x10] sm:$0xff]
  %v31 = vld [vmem:[%s1 + $0x18] sm:$0xff]
  %v32 = vld [vmem:[%s2] sm:$0x1]
  %v34 = vperm.slane %v32, 0
  %vm36 = vcmask 261120
  %v38 = vsel %vm36, %v26, 0
  %v41 = vsel %vm36, %v27, 0
  %43 = vmatpush.msra.mxu0 0.0
  %44 = vmatpush.msra.mxu0 0.0
  %45 = vmatpush.msra.mxu0 0.0
  %46 = vmatpush.msra.mxu0 0.0
  %47 = vmatpush.msra.mxu0 0.0
  %48 = vmatpush.msra.mxu0 0.0
  %49 = vmatpush.msra.mxu0 0.0
  %50 = vmatpush.msra.mxu0 0.0
  %51 = vmatpush.msra.mxu0 0.0
  %52 = vmatpush.msra.mxu0 0.0
  %53 = vmatpush.msra.mxu0 0.0
  %54 = vmatpush.msra.mxu0 0.0
  %55 = vmatpush.msra.mxu0 %v31
  %56 = vmatpush.msra.mxu0 %v30
  %57 = vmatpush.msra.mxu0 %v29
  %58 = vmatpush.msra.mxu0 %v28
  %59 = vmatmul.f32.gmra.mxu0 %v38
  %v60 = vpop.f32.mrf.mxu0
  %v61 = vadd.f32 %v34, %v60
  %62 = vmatmul.f32.gmra.mxu0 %v41
  %v63 = vpop.f32.mrf.mxu0
  %v64 = vadd.f32 %v34, %v63
  %65 = vdwg.mxu0
  %v66 = vmax.f32 %v61, 0.0
  %v67 = vmax.f32 %v64, 0.0
  %v68 = vld [vmem:[%s3] sm:$0xff]
  %v69 = vld [vmem:[%s3 + $0x8] sm:$0xff]
  %v70 = vld [vmem:[%s3 + $0x10] sm:$0xff]
  %v71 = vld [vmem:[%s3 + $0x18] sm:$0xff]
  %v72 = vld [vmem:[%s3 + $0x20] sm:$0xff]
  %v73 = vld [vmem:[%s3 + $0x28] sm:$0xff]
  %v74 = vld [vmem:[%s3 + $0x30] sm:$0xff]
  %v75 = vld [vmem:[%s3 + $0x38] sm:$0xff]
  %v76 = vld [vmem:[%s4] sm:$0x1]
  %v78 = vperm.slane %v76, 0
  %vm80 = vcmask 523264
  %v82 = vsel %vm80, %v66, 0
  %v85 = vsel %vm80, %v67, 0
  %87 = vmatpush.msra.mxu0 0.0
  %88 = vmatpush.msra.mxu0 0.0
  %89 = vmatpush.msra.mxu0 0.0
  %90 = vmatpush.msra.mxu0 0.0
  %91 = vmatpush.msra.mxu0 0.0
  %92 = vmatpush.msra.mxu0 0.0
  %93 = vmatpush.msra.mxu0 0.0
  %94 = vmatpush.msra.mxu0 0.0
  %95 = vmatpush.msra.mxu0 %v75
  %96 = vmatpush.msra.mxu0 %v74
  %97 = vmatpush.msra.mxu0 %v73
  %98 = vmatpush.msra.mxu0 %v72
  %99 = vmatpush.msra.mxu0 %v71
  %100 = vmatpush.msra.mxu0 %v70
  %101 = vmatpush.msra.mxu0 %v69
  %102 = vmatpush.msra.mxu0 %v68
  %103 = vmatmul.f32.gmra.mxu0 %v82
  %v104 = vpop.f32.mrf.mxu0
  %v105 = vadd.f32 %v78, %v104
  %106 = vmatmul.f32.gmra.mxu0 %v85
  %v107 = vpop.f32.mrf.mxu0
  %v108 = vadd.f32 %v78, %v107
  %109 = vdwg.mxu0
  %v110 = vmax.f32 %v105, 0.0
  %v111 = vmax.f32 %v108, 0.0
  %v112 = vld [vmem:[%s5] sm:$0xff]
  %v113 = vld [vmem:[%s5 + $0x8] sm:$0xff]
  %v114 = vld [vmem:[%s5 + $0x10] sm:$0xff]
  %v115 = vld [vmem:[%s5 + $0x18] sm:$0xff]
  %v116 = vld [vmem:[%s6] sm:$0x1]
  %v118 = vperm.slane %v116, 0
  %v121 = vsel %vm36, %v110, 0
  %v124 = vsel %vm36, %v111, 0
  %126 = vmatpush.msra.mxu0 0.0
  %127 = vmatpush.msra.mxu0 0.0
  %128 = vmatpush.msra.mxu0 0.0
  %129 = vmatpush.msra.mxu0 0.0
  %130 = vmatpush.msra.mxu0 0.0
  %131 = vmatpush.msra.mxu0 0.0
  %132 = vmatpush.msra.mxu0 0.0
  %133 = vmatpush.msra.mxu0 0.0
  %134 = vmatpush.msra.mxu0 0.0
  %135 = vmatpush.msra.mxu0 0.0
  %136 = vmatpush.msra.mxu0 0.0
  %137 = vmatpush.msra.mxu0 0.0
  %138 = vmatpush.msra.mxu0 %v115
  %139 = vmatpush.msra.mxu0 %v114
  %140 = vmatpush.msra.mxu0 %v113
  %141 = vmatpush.msra.mxu0 %v112
  %142 = vmatmul.f32.gmra.mxu0 %v121
  %v143 = vpop.f32.mrf.mxu0
  %v144 = vadd.f32 %v118, %v143
  %145 = vmatmul.f32.gmra.mxu0 %v124
  %v146 = vpop.f32.mrf.mxu0
  %v147 = vadd.f32 %v118, %v146
  %148 = vdwg.mxu0
  %vm149 = vcmask 31744
  %150 = vst.msk [vmem:[%s7] sm:$0xff] %vm149, %v144
  %vm151 = vcmask 25600
  %152 = vst.msk [vmem:[%s7 + $0x8] sm:$0x3] %vm151, %v147
  // Predicated region
  $region30: #{attack_adv_train_forward.1} parent=0 // pred_check
    _
  $region31: #{attack_adv_train_forward.1} parent=0 // pred_check_branch
    %154 = sbr.rel (0) target = $region33
  $region32: #{attack_adv_train_forward.1} parent=0 // pred_region
    _
  $region33: #{attack_adv_train_forward.1} parent=0 // pred_fallthru
    _
  // Predicated region
  $region34: #{attack_adv_train_forward.1} parent=0 // pred_check
    _
  $region35: #{attack_adv_train_forward.1} parent=0 // pred_check_branch
    %156 = sbr.rel (0) target = $region37
  $region36: #{attack_adv_train_forward.1} parent=0 // pred_region
    _
  $region37: #{attack_adv_train_forward.1} parent=0 // pred_fallthru
    _

</llo_original>
